<compile_context>
chip_gen: v7x
topology: tpu7x:2x2x1
jax: 0.10.0
libtpu: 0.0.40
codegen_flags: <defaults>
</compile_context>

<pallas_src>
import jax
import jax.numpy as jnp
from jax.experimental import pallas as pl
from jax.experimental.pallas import tpu as pltpu


# ----------------------------------------------------------------------------
# Helpers
# ----------------------------------------------------------------------------
def _round_up(x, m):
    return ((x + m - 1) // m) * m


def _pad(a, target_shape):
    widths = [(0, t - s) for s, t in zip(a.shape, target_shape)]
    if all(w == (0, 0) for w in widths):
        return a
    return jnp.pad(a, widths)


def _vmem_capacity_bytes():
    try:
        return int(pltpu.get_tpu_info().vmem_capacity_bytes)
    except Exception:
        return 128 * 1024 * 1024            # v5e/v6e default if query unavailable


def _plan(B, T, D_in_p, itemsize, resident_weight_bytes, t_tile=None):
    """Pick (TB, B_pad, TT, T_pad, vmem_limit)."""
    vmem_cap = _vmem_capacity_bytes()
    # Leave headroom for compiler scratch: 48 MiB on v7x (64 MiB VMEM),
    # ~96 MiB on v5e/v6e (128 MiB VMEM).
    vmem_limit = min(int(vmem_cap * 3 // 4), 100 * 1024 * 1024)

    # Small TB / large TT: long contiguous DMA segments, and >=2 B tiles when
    # B allows it so the 'parallel' axis shards across v7x's two TensorCores.
    if B >= 16:
        TB = min(32, _round_up((B + 1) // 2, 8))
    else:
        TB = _round_up(max(B, 1), 8)
    B_pad = _round_up(B, TB)

    if t_tile is not None:
        TT = max(8, _round_up(int(t_tile), 8))
    else:
        acc_bytes = TB * D_in_p * 4
        headroom = 6 * 1024 * 1024
        x_budget = vmem_limit - resident_weight_bytes - acc_bytes - headroom
        x_budget = max(x_budget, 4 * 1024 * 1024)
        per_buf = min(16 * 1024 * 1024, x_budget // 2)   # double-buffered x
        TT = per_buf // max(1, TB * D_in_p * itemsize)
        TT = max(8, (TT // 8) * 8)
    TT = min(TT, _round_up(T, 8))
    T_pad = _round_up(T, TT)
    return TB, B_pad, int(TT), T_pad, vmem_limit


# ----------------------------------------------------------------------------
# Kernels — fused streaming reduction + head
# ----------------------------------------------------------------------------
def _mean_fused_kernel(inv_t_ref, x_ref, wp_ref, bp_ref, o_ref, acc_ref):
    # inv_t_ref: SMEM (1,) f32
    # x_ref : (TB, TT, D_in_p)  wp_ref: (D_in_p, D_out_p)  bp_ref: (1, D_out_p)
    # o_ref : (TB, D_out_p)     acc_ref: (TB, D_in_p) f32 scratch
    t = pl.program_id(1)

    @pl.when(t == 0)
    def _():
        acc_ref[...] = jnp.zeros_like(acc_ref)

    acc_ref[...] += jnp.sum(x_ref[...].astype(jnp.float32), axis=1)

    @pl.when(t == pl.num_programs(1) - 1)
    def _():
        pooled = (acc_ref[...] * inv_t_ref[0]).astype(wp_ref.dtype)
        out = jnp.dot(pooled, wp_ref[...], preferred_element_type=jnp.float32)
        out = out + bp_ref[...].astype(jnp.float32)
        o_ref[...] = out.astype(o_ref.dtype)


def _mlp_fused_kernel(inv_t_ref, x_ref, w1_ref, b1_ref, w2_ref, b2_ref,
                      wp_ref, bp_ref, o_ref, acc_ref):
    t = pl.program_id(1)

    @pl.when(t == 0)
    def _():
        acc_ref[...] = jnp.zeros_like(acc_ref)

    # AdaptiveAvgPool1d(1) after transpose(1,2) in PyTorch == mean over T.
    acc_ref[...] += jnp.sum(x_ref[...].astype(jnp.float32), axis=1)

    @pl.when(t == pl.num_programs(1) - 1)
    def _():
        pooled = (acc_ref[...] * inv_t_ref[0]).astype(w1_ref.dtype)
        h = jnp.dot(pooled, w1_ref[...], preferred_element_type=jnp.float32)
        h = jnp.maximum(h + b1_ref[...].astype(jnp.float32), 0.0)        # ReLU
        h = jnp.dot(h.astype(w2_ref.dtype), w2_ref[...],
                    preferred_element_type=jnp.float32)
        h = h + b2_ref[...].astype(jnp.float32)
        out = jnp.dot(h.astype(wp_ref.dtype), wp_ref[...],
                      preferred_element_type=jnp.float32)
        out = out + bp_ref[...].astype(jnp.float32)
        o_ref[...] = out.astype(o_ref.dtype)


# ----------------------------------------------------------------------------
# Kernels — de-fused path (streaming pool, then small head)
# ----------------------------------------------------------------------------
def _mean_pool_kernel(inv_t_ref, x_ref, o_ref, acc_ref):
    # o_ref: (TB, D_in_p) f32 pooled output
    t = pl.program_id(1)

    @pl.when(t == 0)
    def _():
        acc_ref[...] = jnp.zeros_like(acc_ref)

    acc_ref[...] += jnp.sum(x_ref[...].astype(jnp.float32), axis=1)

    @pl.when(t == pl.num_programs(1) - 1)
    def _():
        o_ref[...] = acc_ref[...] * inv_t_ref[0]


def _proj_head_kernel(p_ref, wp_ref, bp_ref, o_ref):
    pooled = p_ref[...].astype(wp_ref.dtype)
    out = jnp.dot(pooled, wp_ref[...], preferred_element_type=jnp.float32)
    out = out + bp_ref[...].astype(jnp.float32)
    o_ref[...] = out.astype(o_ref.dtype)


def _mlp_head_kernel(p_ref, w1_ref, b1_ref, w2_ref, b2_ref, wp_ref, bp_ref, o_ref):
    pooled = p_ref[...].astype(w1_ref.dtype)
    h = jnp.dot(pooled, w1_ref[...], preferred_element_type=jnp.float32)
    h = jnp.maximum(h + b1_ref[...].astype(jnp.float32), 0.0)
    h = jnp.dot(h.astype(w2_ref.dtype), w2_ref[...],
                preferred_element_type=jnp.float32)
    h = h + b2_ref[...].astype(jnp.float32)
    out = jnp.dot(h.astype(wp_ref.dtype), wp_ref[...],
                  preferred_element_type=jnp.float32)
    out = out + bp_ref[...].astype(jnp.float32)
    o_ref[...] = out.astype(o_ref.dtype)


# ----------------------------------------------------------------------------
# pallas_call builders
# ----------------------------------------------------------------------------
def _smem_spec():
    return pl.BlockSpec(memory_space=pltpu.MemorySpace.SMEM)


def _resident(shape, index_map):
    # Constant-index weight/bias block: resident in VMEM, single-buffered.
    return pl.BlockSpec(shape, index_map, pipeline_mode=pl.Buffered(1))


def _call_mean_pool(x_p, inv_t, TB, TT, vmem_limit):
    B_pad, T_pad, D_in_p = x_p.shape
    itemsize = jnp.dtype(x_p.dtype).itemsize
    grid = (B_pad // TB, T_pad // TT)
    bytes_accessed = x_p.size * itemsize + B_pad * D_in_p * 4
    return pl.pallas_call(
        _mean_pool_kernel,
        out_shape=jax.ShapeDtypeStruct((B_pad, D_in_p), jnp.float32),
        grid_spec=pltpu.PrefetchScalarGridSpec(
            num_scalar_prefetch=0,
            grid=grid,
            in_specs=[
                _smem_spec(),
                pl.BlockSpec((TB, TT, D_in_p), lambda b, t: (b, t, 0)),
            ],
            out_specs=pl.BlockSpec((TB, D_in_p), lambda b, t: (b, 0)),
            scratch_shapes=[pltpu.VMEM((TB, D_in_p), jnp.float32)],
        ),
        compiler_params=pltpu.CompilerParams(
            dimension_semantics=("parallel", "arbitrary"),
            vmem_limit_bytes=vmem_limit),
        cost_estimate=pl.CostEstimate(
            flops=int(B_pad * T_pad * D_in_p), transcendentals=0,
            bytes_accessed=int(bytes_accessed)),
    )(inv_t, x_p)


def _call_proj_head(pooled_p, wp, bp, out_dtype, TB, vmem_limit):
    B_pad, D_in_p = pooled_p.shape
    D_out_p = wp.shape[1]
    grid = (B_pad // TB,)
    return pl.pallas_call(
        _proj_head_kernel,
        out_shape=jax.ShapeDtypeStruct((B_pad, D_out_p), out_dtype),
        grid_spec=pltpu.PrefetchScalarGridSpec(
            num_scalar_prefetch=0,
            grid=grid,
            in_specs=[
                pl.BlockSpec((TB, D_in_p), lambda b: (b, 0)),
                _resident((D_in_p, D_out_p), lambda b: (0, 0)),
                _resident((1, D_out_p), lambda b: (0, 0)),
            ],
            out_specs=pl.BlockSpec((TB, D_out_p), lambda b: (b, 0)),
        ),
        compiler_params=pltpu.CompilerParams(
            dimension_semantics=("parallel",),
            vmem_limit_bytes=vmem_limit),
    )(pooled_p, wp, bp)


def _call_mlp_head(pooled_p, w1, b1, w2, b2, wp, bp, out_dtype, TB, vmem_limit):
    B_pad, D_in_p = pooled_p.shape
    D_out_p = wp.shape[1]
    grid = (B_pad // TB,)
    return pl.pallas_call(
        _mlp_head_kernel,
        out_shape=jax.ShapeDtypeStruct((B_pad, D_out_p), out_dtype),
        grid_spec=pltpu.PrefetchScalarGridSpec(
            num_scalar_prefetch=0,
            grid=grid,
            in_specs=[
                pl.BlockSpec((TB, D_in_p), lambda b: (b, 0)),
                _resident((D_in_p, D_in_p), lambda b: (0, 0)),
                _resident((1, D_in_p), lambda b: (0, 0)),
                _resident((D_in_p, D_in_p), lambda b: (0, 0)),
                _resident((1, D_in_p), lambda b: (0, 0)),
                _resident((D_in_p, D_out_p), lambda b: (0, 0)),
                _resident((1, D_out_p), lambda b: (0, 0)),
            ],
            out_specs=pl.BlockSpec((TB, D_out_p), lambda b: (b, 0)),
        ),
        compiler_params=pltpu.CompilerParams(
            dimension_semantics=("parallel",),
            vmem_limit_bytes=vmem_limit),
    )(pooled_p, w1, b1, w2, b2, wp, bp)


# ----------------------------------------------------------------------------
# Public wrappers
# ----------------------------------------------------------------------------
def modality_compressor_mean(x, w_proj, b_proj, *, t_tile=None, fuse=None):
    """x: (B, T, D_in) -> (B, 1, D_out).  method='mean' (module default)."""
    B, T, D_in = x.shape
    D_out = w_proj.shape[1]
    D_in_p = _round_up(D_in, 128)
    D_out_p = _round_up(D_out, 128)
    itemsize = jnp.dtype(x.dtype).itemsize
    w_item = jnp.dtype(w_proj.dtype).itemsize

    weight_bytes = (D_in_p * D_out_p + D_out_p) * w_item     # single-buffered
    TB, B_pad, TT, T_pad, vmem_limit = _plan(
        B, T, D_in_p, itemsize, weight_bytes, t_tile)
    if fuse is None:
        fuse = weight_bytes <= vmem_limit // 4

    x_p = _pad(x, (B_pad, T_pad, D_in_p))
    wp = _pad(w_proj, (D_in_p, D_out_p))
    bp = _pad(b_proj.reshape(1, D_out), (1, D_out_p))
    inv_t = jnp.full((1,), 1.0 / T, jnp.float32)

    if fuse:
        grid = (B_pad // TB, T_pad // TT)
        bytes_accessed = (x_p.size * itemsize + (wp.size + bp.size) * w_item
                          + B_pad * D_out_p * itemsize)
        flops = B_pad * T_pad * D_in_p + 2 * B_pad * D_in_p * D_out_p
        out = pl.pallas_call(
            _mean_fused_kernel,
            out_shape=jax.ShapeDtypeStruct((B_pad, D_out_p), x.dtype),
            grid_spec=pltpu.PrefetchScalarGridSpec(
                num_scalar_prefetch=0,
                grid=grid,
                in_specs=[
                    _smem_spec(),
                    pl.BlockSpec((TB, TT, D_in_p), lambda b, t: (b, t, 0)),
                    _resident((D_in_p, D_out_p), lambda b, t: (0, 0)),
                    _resident((1, D_out_p), lambda b, t: (0, 0)),
                ],
                out_specs=pl.BlockSpec((TB, D_out_p), lambda b, t: (b, 0)),
                scratch_shapes=[pltpu.VMEM((TB, D_in_p), jnp.float32)],
            ),
            compiler_params=pltpu.CompilerParams(
                dimension_semantics=("parallel", "arbitrary"),
                vmem_limit_bytes=vmem_limit),
            cost_estimate=pl.CostEstimate(
                flops=int(flops), transcendentals=0,
                bytes_accessed=int(bytes_accessed)),
        )(inv_t, x_p, wp, bp)
    else:
        pooled = _call_mean_pool(x_p, inv_t, TB, TT, vmem_limit)
        out = _call_proj_head(pooled, wp, bp, x.dtype, TB, vmem_limit)

    return out[:B, None, :D_out]                                  # (B, 1, D_out)


def modality_compressor_mlp(x, w1, b1, w2, b2, w_proj, b_proj, *,
                            t_tile=None, fuse=None):
    """x: (B, T, D_in) -> (B, 1, D_out).  method='mlp'."""
    B, T, D_in = x.shape
    D_out = w_proj.shape[1]
    D_in_p = _round_up(D_in, 128)
    D_out_p = _round_up(D_out, 128)
    itemsize = jnp.dtype(x.dtype).itemsize
    w_item = jnp.dtype(w1.dtype).itemsize

    weight_bytes = (2 * D_in_p * D_in_p + 2 * D_in_p
                    + D_in_p * D_out_p + D_out_p) * w_item        # single-buffered
    TB, B_pad, TT, T_pad, vmem_limit = _plan(
        B, T, D_in_p, itemsize, weight_bytes, t_tile)
    if fuse is None:
        fuse = weight_bytes <= vmem_limit // 4

    x_p = _pad(x, (B_pad, T_pad, D_in_p))
    w1p = _pad(w1, (D_in_p, D_in_p))
    b1p = _pad(b1.reshape(1, D_in), (1, D_in_p))
    w2p = _pad(w2, (D_in_p, D_in_p))
    b2p = _pad(b2.reshape(1, D_in), (1, D_in_p))
    wpp = _pad(w_proj, (D_in_p, D_out_p))
    bpp = _pad(b_proj.reshape(1, D_out), (1, D_out_p))
    inv_t = jnp.full((1,), 1.0 / T, jnp.float32)

    if fuse:
        grid = (B_pad // TB, T_pad // TT)
        bytes_accessed = x_p.size * itemsize + weight_bytes + B_pad * D_out_p * itemsize
        flops = (B_pad * T_pad * D_in_p + 4 * B_pad * D_in_p * D_in_p
                 + 2 * B_pad * D_in_p * D_out_p)
        out = pl.pallas_call(
            _mlp_fused_kernel,
            out_shape=jax.ShapeDtypeStruct((B_pad, D_out_p), x.dtype),
            grid_spec=pltpu.PrefetchScalarGridSpec(
                num_scalar_prefetch=0,
                grid=grid,
                in_specs=[
                    _smem_spec(),
                    pl.BlockSpec((TB, TT, D_in_p), lambda b, t: (b, t, 0)),
                    _resident((D_in_p, D_in_p), lambda b, t: (0, 0)),
                    _resident((1, D_in_p), lambda b, t: (0, 0)),
                    _resident((D_in_p, D_in_p), lambda b, t: (0, 0)),
                    _resident((1, D_in_p), lambda b, t: (0, 0)),
                    _resident((D_in_p, D_out_p), lambda b, t: (0, 0)),
                    _resident((1, D_out_p), lambda b, t: (0, 0)),
                ],
                out_specs=pl.BlockSpec((TB, D_out_p), lambda b, t: (b, 0)),
                scratch_shapes=[pltpu.VMEM((TB, D_in_p), jnp.float32)],
            ),
            compiler_params=pltpu.CompilerParams(
                dimension_semantics=("parallel", "arbitrary"),
                vmem_limit_bytes=vmem_limit),
            cost_estimate=pl.CostEstimate(
                flops=int(flops), transcendentals=0,
                bytes_accessed=int(bytes_accessed)),
        )(inv_t, x_p, w1p, b1p, w2p, b2p, wpp, bpp)
    else:
        pooled = _call_mean_pool(x_p, inv_t, TB, TT, vmem_limit)
        out = _call_mlp_head(pooled, w1p, b1p, w2p, b2p, wpp, bpp,
                             x.dtype, TB, vmem_limit)

    return out[:B, None, :D_out]                                  # (B, 1, D_out)


# ----------------------------------------------------------------------------
# Pure-JAX references (mirror the PyTorch forward exactly)
# ----------------------------------------------------------------------------
def _ref_mean(x, w_proj, b_proj):
    pooled = jnp.mean(x, axis=1, keepdims=True)                   # (B, 1, D_in)
    return pooled @ w_proj + b_proj                               # (B, 1, D_out)


def _ref_mlp(x, w1, b1, w2, b2, w_proj, b_proj):
    pooled = jnp.mean(x, axis=1)                                  # AdaptiveAvgPool1d(1)
    h = jnp.maximum(pooled @ w1 + b1, 0.0)
    h = h @ w2 + b2
    return (h[:, None, :] @ w_proj) + b_proj


# ----------------------------------------------------------------------------
# Deterministic parameter init (shapes from the nn.Module __init__)
# ----------------------------------------------------------------------------
def _init_linear(key, fan_in, fan_out, dtype=jnp.float32):
    kw, kb = jax.random.split(key)
    bound = 1.0 / (fan_in ** 0.5)
    w = jax.random.uniform(kw, (fan_in, fan_out), dtype, -bound, bound)
    b = jax.random.uniform(kb, (fan_out,), dtype, -bound, bound)
    return w, b


if __name__ == "__main__":
    B, T, D_in, D_out = 2, 8, 32, 16

    key = jax.random.PRNGKey(0)
    kx, kx2, kx3, kp, k1, k2 = jax.random.split(key, 6)

    x = jax.random.normal(kx, (B, T, D_in), jnp.float32)
    w_proj, b_proj = _init_linear(kp, D_in, D_out)                # projector
    w1, b1 = _init_linear(k1, D_in, D_in)                         # mlp.Linear #1
    w2, b2 = _init_linear(k2, D_in, D_in)                         # mlp.Linear #2

    # --- method='mean' (module default), fused path, single-tile T ---
    out_mean = jax.block_until_ready(modality_compressor_mean(x, w_proj, b_proj))
    ref_mean = _ref_mean(x, w_proj, b_proj)
    assert out_mean.shape == (B, 1, D_out)
    assert jnp.allclose(out_mean, ref_mean, atol=1e-4, rtol=1e-4)

    # --- method='mlp', fused path, single-tile T ---
    out_mlp = jax.block_until_ready(
        modality_compressor_mlp(x, w1, b1, w2, b2, w_proj, b_proj))
    ref_mlp = _ref_mlp(x, w1, b1, w2, b2, w_proj, b_proj)
    assert out_mlp.shape == (B, 1, D_out)
    assert jnp.allclose(out_mlp, ref_mlp, atol=1e-4, rtol=1e-4)

    # --- multi-tile reduction (T=20, t_tile=8 -> 3 T-steps, padded tail) ---
    T2 = 20
    x2 = jax.random.normal(kx2, (B, T2, D_in), jnp.float32)
    out_mean2 = jax.block_until_ready(
        modality_compressor_mean(x2, w_proj, b_proj, t_tile=8))
    assert jnp.allclose(out_mean2, _ref_mean(x2, w_proj, b_proj),
                        atol=1e-4, rtol=1e-4)
    out_mlp2 = jax.block_until_ready(
        modality_compressor_mlp(x2, w1, b1, w2, b2, w_proj, b_proj, t_tile=8))
    assert jnp.allclose(out_mlp2, _ref_mlp(x2, w1, b1, w2, b2, w_proj, b_proj),
                        atol=1e-4, rtol=1e-4)

    # --- multi-B-tile (B=20 -> TB=16, 2 B tiles, padded batch) + de-fused path ---
    B3, T3 = 20, 12
    x3 = jax.random.normal(kx3, (B3, T3, D_in), jnp.float32)
    out_mean3 = jax.block_until_ready(
        modality_compressor_mean(x3, w_proj, b_proj, t_tile=8, fuse=False))
    assert out_mean3.shape == (B3, 1, D_out)
    assert jnp.allclose(out_mean3, _ref_mean(x3, w_proj, b_proj),
                        atol=1e-4, rtol=1e-4)
    out_mlp3 = jax.block_until_ready(
        modality_compressor_mlp(x3, w1, b1, w2, b2, w_proj, b_proj,
                                t_tile=8, fuse=False))
    assert out_mlp3.shape == (B3, 1, D_out)
    assert jnp.allclose(out_mlp3, _ref_mlp(x3, w1, b1, w2, b2, w_proj, b_proj),
                        atol=1e-4, rtol=1e-4)

    print("KERNEL_OK")
</pallas_src>

<mosaic_0001>
module attributes {stable_mosaic.version = 11 : i64} {
  func.func @_mean_fused_kernel(%arg0: i32, %arg1: i32, %arg2: memref<1xf32, #tpu.memory_space<smem>>, %arg3: memref<8x8x128xf32, #tpu.memory_space<vmem>>, %arg4: memref<128x128xf32, #tpu.memory_space<vmem>>, %arg5: memref<1x128xf32, #tpu.memory_space<vmem>>, %arg6: memref<8x128xf32, #tpu.memory_space<vmem>>, %arg7: memref<8x128xf32, #tpu.memory_space<vmem>>) attributes {dimension_semantics = [#tpu.dimension_semantics<parallel>, #tpu.dimension_semantics<arbitrary>], iteration_bounds = array<i64: 1, 1>, scalar_prefetch = 0 : i64, scratch_operands = 1 : i64, tpu.core_type = #tpu.core_type<tc>, window_params = [{transform_indices = @transform_0, window_bounds = array<i64: 1>}, {transform_indices = @transform_1, window_bounds = array<i64: 8, 8, 128>}, {pipeline_mode = #tpu.pipeline_mode<synchronous>, transform_indices = @transform_2, window_bounds = array<i64: 128, 128>}, {pipeline_mode = #tpu.pipeline_mode<synchronous>, transform_indices = @transform_3, window_bounds = array<i64: 1, 128>}, {transform_indices = @transform_4, window_bounds = array<i64: 8, 128>}]} {
    %c0_i32 = arith.constant 0 : i32
    %0 = arith.cmpi eq, %arg1, %c0_i32 : i32
    %1 = arith.extui %0 : i1 to i32
    %c0_i32_0 = arith.constant 0 : i32
    %2 = arith.cmpi ne, %1, %c0_i32_0 : i32
    scf.if %2 {
      %cst_9 = arith.constant 0.000000e+00 : f32
      %11 = vector.broadcast %cst_9 : f32 to vector<8x128xf32>
      %c0_10 = arith.constant 0 : index
      %c0_11 = arith.constant 0 : index
      %12 = vector.load %arg7[%c0_10, %c0_11] : memref<8x128xf32, #tpu.memory_space<vmem>>, vector<8x128xf32>
      tpu.vector_store %arg7[%c0_10, %c0_11], %11 {strides = array<i32>} : memref<8x128xf32, #tpu.memory_space<vmem>>, vector<8x128xf32>,
    } else {
    }
    %c0 = arith.constant 0 : index
    %c0_1 = arith.constant 0 : index
    %3 = vector.load %arg7[%c0, %c0_1] : memref<8x128xf32, #tpu.memory_space<vmem>>, vector<8x128xf32>
    %c0_2 = arith.constant 0 : index
    %c0_3 = arith.constant 0 : index
    %c0_4 = arith.constant 0 : index
    %4 = vector.load %arg3[%c0_2, %c0_3, %c0_4] : memref<8x8x128xf32, #tpu.memory_space<vmem>>, vector<8x8x128xf32>
    %cst = arith.constant dense<0.000000e+00> : vector<8x128xf32>
    %5 = vector.multi_reduction <add>, %4, %cst [1] : vector<8x8x128xf32> to vector<8x128xf32>
    %6 = arith.addf %3, %5 : vector<8x128xf32>
    %c0_5 = arith.constant 0 : index
    %c0_6 = arith.constant 0 : index
    %7 = vector.load %arg7[%c0_5, %c0_6] : memref<8x128xf32, #tpu.memory_space<vmem>>, vector<8x128xf32>
    tpu.vector_store %arg7[%c0_5, %c0_6], %6 {strides = array<i32>} : memref<8x128xf32, #tpu.memory_space<vmem>>, vector<8x128xf32>,
    %c0_i32_7 = arith.constant 0 : i32
    %8 = arith.cmpi eq, %arg1, %c0_i32_7 : i32
    %9 = arith.extui %8 : i1 to i32
    %c0_i32_8 = arith.constant 0 : i32
    %10 = arith.cmpi ne, %9, %c0_i32_8 : i32
    scf.if %10 {
      %c0_9 = arith.constant 0 : index
      %c0_10 = arith.constant 0 : index
      %11 = vector.load %arg7[%c0_9, %c0_10] : memref<8x128xf32, #tpu.memory_space<vmem>>, vector<8x128xf32>
      %c0_11 = arith.constant 0 : index
      %12 = memref.load %arg2[%c0_11] : memref<1xf32, #tpu.memory_space<smem>>
      %13 = vector.broadcast %12 : f32 to vector<8x128xf32>
      %14 = arith.mulf %11, %13 : vector<8x128xf32>
      %c0_12 = arith.constant 0 : index
      %c0_13 = arith.constant 0 : index
      %15 = vector.load %arg4[%c0_12, %c0_13] : memref<128x128xf32, #tpu.memory_space<vmem>>, vector<128x128xf32>
      %cst_14 = arith.constant dense<0.000000e+00> : vector<8x128xf32>
      %16 = tpu.matmul %14, %15, %cst_14 {dimension_numbers = #tpu.dot_dimension_numbers<[1], [0], [0], [1], [0, 0, 1, 1], [], []>} : vector<8x128xf32>, vector<128x128xf32>, vector<8x128xf32> -> vector<8x128xf32>
      %c0_15 = arith.constant 0 : index
      %c0_16 = arith.constant 0 : index
      %17 = vector.load %arg5[%c0_15, %c0_16] : memref<1x128xf32, #tpu.memory_space<vmem>>, vector<1x128xf32>
      %18 = vector.broadcast %17 : vector<1x128xf32> to vector<8x128xf32>
      %19 = arith.addf %16, %18 : vector<8x128xf32>
      %c0_17 = arith.constant 0 : index
      %c0_18 = arith.constant 0 : index
      %20 = vector.load %arg6[%c0_17, %c0_18] : memref<8x128xf32, #tpu.memory_space<vmem>>, vector<8x128xf32>
      tpu.vector_store %arg6[%c0_17, %c0_18], %19 {strides = array<i32>} : memref<8x128xf32, #tpu.memory_space<vmem>>, vector<8x128xf32>,
    } else {
    }
    return
  }
  func.func @transform_0(%arg0: i32, %arg1: i32) -> i32 {
    %c0_i32 = arith.constant 0 : i32
    %c0_i32_0 = arith.constant 0 : i32
    return %c0_i32 : i32
  }
  func.func @transform_1(%arg0: i32, %arg1: i32) -> (i32, i32, i32) {
    %c0_i32 = arith.constant 0 : i32
    %c0_i32_0 = arith.constant 0 : i32
    return %arg0, %arg1, %c0_i32 : i32, i32, i32
  }
  func.func @transform_2(%arg0: i32, %arg1: i32) -> (i32, i32) {
    %c0_i32 = arith.constant 0 : i32
    %c0_i32_0 = arith.constant 0 : i32
    %c0_i32_1 = arith.constant 0 : i32
    return %c0_i32, %c0_i32_0 : i32, i32
  }
  func.func @transform_3(%arg0: i32, %arg1: i32) -> (i32, i32) {
    %c0_i32 = arith.constant 0 : i32
    %c0_i32_0 = arith.constant 0 : i32
    %c0_i32_1 = arith.constant 0 : i32
    return %c0_i32, %c0_i32_0 : i32, i32
  }
  func.func @transform_4(%arg0: i32, %arg1: i32) -> (i32, i32) {
    %c0_i32 = arith.constant 0 : i32
    %c0_i32_0 = arith.constant 0 : i32
    return %arg0, %c0_i32 : i32, i32
  }
}

</mosaic_0001>

<llo_original>
// kernel: tpu_custom_call.1
$region0: #{tpu_custom_call.1}
  #allocation0 [shape = 'u32[]', space=smem, size = 0x4, offset = 0x4, fixed_abs, tag = 'smem constant byte address 0x4 - core index']
  #allocation1 [shape = 'u32[144,128]{1,0:T(1,128)}', space=vmem, size = 0x12000, scoped, tag = 'internal scratch']
  #allocation2 [shape = 'f32[8,128]{1,0:T(8,128)}', space=vmem, size = 0x1000, scoped, tag = 'scratch operand']
  #allocation3 [shape = 'f32[1]{0:T(128)S(6)}', space=smem, size = 0x200, scoped, tag = 'scoped memory for tpu_custom_call.1']
  %s0 = inlined_call_operand.<no memory space> [shape: f32[1], index: 0, kind: input, shape index: {}]
  %s1 = inlined_call_operand.hbm [shape: f32[8,8,128], index: 1, kind: input, shape index: {}]
  %s2 = inlined_call_operand.hbm [shape: f32[128,128], index: 2, kind: input, shape index: {}]
  %s3 = inlined_call_operand.hbm [shape: f32[1,128], index: 3, kind: input, shape index: {}]
  %s4 = inlined_call_operand.hbm [shape: f32[8,128], index: 4, kind: output, shape index: {}]
  %s5 = sld [smem:[#allocation0]]
  $region46: #{tpu_custom_call.1} parent=0
    _
  %s7 = ssub.s32 1, %s5
  %s8 = scalar_select 0, %s7, %s5
  %9 = sst [smem:[#allocation3]] %s0
  $region1: #{tpu_custom_call.1} parent=0
    #allocation4 [shape = 'u8[32768]{0}', space=vmem, size = 0x8000, scoped, tag = 'input window, operand 1, single buffered']
    #allocation5 [shape = 's32[1]{0}', space=sflag, size = 0x4, scoped, tag = 'scoped memory for tpu_custom_call.1']
    #allocation6 [shape = 's32[1]{0}', space=sflag, size = 0x4, scoped, tag = 'scoped memory for tpu_custom_call.1']
    #allocation7 [shape = 'u8[65536]{0}', space=vmem, size = 0x10000, scoped, tag = 'input window, operand 2, single buffered']
    #allocation8 [shape = 's32[1]{0}', space=sflag, size = 0x4, scoped, tag = 'scoped memory for tpu_custom_call.1']
    #allocation9 [shape = 'u8[512]{0}', space=vmem, size = 0x400, scoped, tag = 'input window, operand 3, single buffered']
    #allocation10 [shape = 'u8[4096]{0}', space=vmem, size = 0x1000, scoped, tag = 'output window, operand 0, single buffered']
    %10 = vsyncpa [#allocation5], 0
    %11 = vsyncpa [#allocation8], 0
    %12 = vsyncpa [#allocation6], 0
    // Predicated region
    $region2: #{tpu_custom_call.1} parent=1 // pred_check
      _
    $region3: #{tpu_custom_call.1} parent=1 // pred_check_branch
      %14 = sbr.rel (0) target = $region5
    $region4: #{tpu_custom_call.1} parent=1 // pred_region
      _
    $region5: #{tpu_custom_call.1} parent=1 // pred_fallthru
      _
    // Predicated region
    $region6: #{tpu_custom_call.1} parent=1 // pred_check
      _
    $region7: #{tpu_custom_call.1} parent=1 // pred_check_branch
      %16 = sbr.rel (0) target = $region9
    $region8: #{tpu_custom_call.1} parent=1 // pred_region
      %s18 = ssub.s32 1024, 1024
      %19 = vsyncadd [#allocation5], %s18
      %s20 = sshll.u32 [#allocation4], 4
      %s21 = int_to_ptr.vmem [resolvable:$true] %s20
      %26 = dma.hbm_to_vmem [thread:$0]  %s1, 1024, %s21, [#allocation5], 128, 128, 8
    $region9: #{tpu_custom_call.1} parent=1 // pred_fallthru
      _
    // Predicated region
    $region10: #{tpu_custom_call.1} parent=1 // pred_check
      _
    $region11: #{tpu_custom_call.1} parent=1 // pred_check_branch
      %28 = sbr.rel (0) target = $region13
    $region12: #{tpu_custom_call.1} parent=1 // pred_region
      %s30 = ssub.s32 2048, 2048
      %31 = vsyncadd [#allocation8], %s30
      %s32 = sshll.u32 [#allocation7], 4
      %s33 = int_to_ptr.vmem [resolvable:$true] %s32
      %38 = dma.hbm_to_vmem [thread:$0]  %s2, 2048, %s33, [#allocation8], 128, 128, 8
    $region13: #{tpu_custom_call.1} parent=1 // pred_fallthru
      _
    // Predicated region
    $region14: #{tpu_custom_call.1} parent=1 // pred_check
      _
    $region15: #{tpu_custom_call.1} parent=1 // pred_check_branch
      %40 = sbr.rel (0) target = $region17
    $region16: #{tpu_custom_call.1} parent=1 // pred_region
      %s42 = ssub.s32 16, 16
      %43 = vsyncadd [#allocation8], %s42
      %s45 = sshll.u32 [#allocation9], 4
      %s46 = int_to_ptr.vmem [resolvable:$true] %s45
      %48 = dma.hbm_to_vmem [thread:$0]  %s3, 16, %s46, [#allocation8]
    $region17: #{tpu_custom_call.1} parent=1 // pred_fallthru
      _
    // Predicated region
    $region18: #{tpu_custom_call.1} parent=1 // pred_check
      _
    $region19: #{tpu_custom_call.1} parent=1 // pred_check_branch
      %50 = sbr.rel (0) target = $region21
    $region20: #{tpu_custom_call.1} parent=1 // pred_region
      %51 = dma.done [#allocation5], 1024
    $region21: #{tpu_custom_call.1} parent=1 // pred_fallthru
      _
    // Predicated region
    $region22: #{tpu_custom_call.1} parent=1 // pred_check
      _
    $region23: #{tpu_custom_call.1} parent=1 // pred_check_branch
      %53 = sbr.rel (0) target = $region25
    $region24: #{tpu_custom_call.1} parent=1 // pred_region
      %54 = dma.done [#allocation8], 2048
    $region25: #{tpu_custom_call.1} parent=1 // pred_fallthru
      _
    // Predicated region
    $region26: #{tpu_custom_call.1} parent=1 // pred_check
      _
    $region27: #{tpu_custom_call.1} parent=1 // pred_check_branch
      %56 = sbr.rel (0) target = $region29
    $region28: #{tpu_custom_call.1} parent=1 // pred_region
      %57 = dma.done [#allocation8], 16
    $region29: #{tpu_custom_call.1} parent=1 // pred_fallthru
      _
    %p58 = scmp.eq.s32.totalorder 0, 0
    // Predicated region
    $region30: #{tpu_custom_call.1} parent=1 // pred_check
      %p59 = pneg %p58
    $region31: #{tpu_custom_call.1} parent=1 // pred_check_branch
      %61 = sbr.rel (%p59) target = $region33
    $region32: #{tpu_custom_call.1} parent=1 // pred_region
      %62 = vst [vmem:[#allocation2] sm:$0xff] 0.0
    $region33: #{tpu_custom_call.1} parent=1 // pred_fallthru
      _
    %v63 = vld [vmem:[#allocation2] sm:$0xff]
    %v64 = vld [vmem:[#allocation4] sm:$0xff]
    %v65 = vld [vmem:[#allocation4 + $0x8] sm:$0xff]
    %v66 = vld [vmem:[#allocation4 + $0x10] sm:$0xff]
    %v67 = vld [vmem:[#allocation4 + $0x18] sm:$0xff]
    %v68 = vld [vmem:[#allocation4 + $0x20] sm:$0xff]
    %v69 = vld [vmem:[#allocation4 + $0x28] sm:$0xff]
    %v70 = vld [vmem:[#allocation4 + $0x30] sm:$0xff]
    %v71 = vld [vmem:[#allocation4 + $0x38] sm:$0xff]
    %v72 = vrot.slane %v64, 4
    %v73 = vadd.f32 %v64, %v72
    %v74 = vrot.slane %v73, 2
    %v75 = vadd.f32 %v73, %v74
    %v76 = vrot.slane %v75, 1
    %v77 = vadd.f32 %v75, %v76
    %v78 = vrot.slane %v65, 4
    %v79 = vadd.f32 %v65, %v78
    %v80 = vrot.slane %v79, 2
    %v81 = vadd.f32 %v79, %v80
    %v82 = vrot.slane %v81, 1
    %v83 = vadd.f32 %v81, %v82
    %v84 = vrot.slane %v66, 4
    %v85 = vadd.f32 %v66, %v84
    %v86 = vrot.slane %v85, 2
    %v87 = vadd.f32 %v85, %v86
    %v88 = vrot.slane %v87, 1
    %v89 = vadd.f32 %v87, %v88
    %v90 = vrot.slane %v67, 4
    %v91 = vadd.f32 %v67, %v90
    %v92 = vrot.slane %v91, 2
    %v93 = vadd.f32 %v91, %v92
    %v94 = vrot.slane %v93, 1
    %v95 = vadd.f32 %v93, %v94
    %v96 = vrot.slane %v68, 4
    %v97 = vadd.f32 %v68, %v96
    %v98 = vrot.slane %v97, 2
    %v99 = vadd.f32 %v97, %v98
    %v100 = vrot.slane %v99, 1
    %v101 = vadd.f32 %v99, %v100
    %v102 = vrot.slane %v69, 4
    %v103 = vadd.f32 %v69, %v102
    %v104 = vrot.slane %v103, 2
    %v105 = vadd.f32 %v103, %v104
    %v106 = vrot.slane %v105, 1
    %v107 = vadd.f32 %v105, %v106
    %v108 = vrot.slane %v70, 4
    %v109 = vadd.f32 %v70, %v108
    %v110 = vrot.slane %v109, 2
    %v111 = vadd.f32 %v109, %v110
    %v112 = vrot.slane %v111, 1
    %v113 = vadd.f32 %v111, %v112
    %v114 = vrot.slane %v71, 4
    %v115 = vadd.f32 %v71, %v114
    %v116 = vrot.slane %v115, 2
    %v117 = vadd.f32 %v115, %v116
    %v118 = vrot.slane %v117, 1
    %v119 = vadd.f32 %v117, %v118
    %vm128 = vcmask 1041409
    %v129 = vsel %vm128, %v83, %v77
    %vm130 = vcmask 1042434
    %v131 = vsel %vm130, %v89, %v129
    %vm132 = vcmask 1043459
    %v133 = vsel %vm132, %v95, %v131
    %vm134 = vcmask 1044484
    %v135 = vsel %vm134, %v101, %v133
    %vm136 = vcmask 1045509
    %v137 = vsel %vm136, %v107, %v135
    %vm138 = vcmask 1046534
    %v139 = vsel %vm138, %v113, %v137
    %vm140 = vcmask 1047559
    %v141 = vsel %vm140, %v119, %v139
    %v143 = vadd.f32 %v63, %v141
    %144 = vst [vmem:[#allocation2] sm:$0xff] %v143
    // Predicated region
    $region34: #{tpu_custom_call.1} parent=1 // pred_check
      %p145 = pneg %p58
    $region35: #{tpu_custom_call.1} parent=1 // pred_check_branch
      %147 = sbr.rel (%p145) target = $region37
    $region36: #{tpu_custom_call.1} parent=1 // pred_region
      %v148 = vld [vmem:[#allocation2] sm:$0xff]
      %s149 = sld [smem:[#allocation3]]
      %v150 = vstv %s149
      %v151 = vmul.f32 %v148, %v150
      %v152 = vld [vmem:[#allocation7] sm:$0xff]
      %v153 = vld [vmem:[#allocation7 + $0x8] sm:$0xff]
      %v154 = vld [vmem:[#allocation7 + $0x10] sm:$0xff]
      %v155 = vld [vmem:[#allocation7 + $0x18] sm:$0xff]
      %v156 = vld [vmem:[#allocation7 + $0x20] sm:$0xff]
      %v157 = vld [vmem:[#allocation7 + $0x28] sm:$0xff]
      %v158 = vld [vmem:[#allocation7 + $0x30] sm:$0xff]
      %v159 = vld [vmem:[#allocation7 + $0x38] sm:$0xff]
      %v160 = vld [vmem:[#allocation7 + $0x40] sm:$0xff]
      %v161 = vld [vmem:[#allocation7 + $0x48] sm:$0xff]
      %v162 = vld [vmem:[#allocation7 + $0x50] sm:$0xff]
      %v163 = vld [vmem:[#allocation7 + $0x58] sm:$0xff]
      %v164 = vld [vmem:[#allocation7 + $0x60] sm:$0xff]
      %v165 = vld [vmem:[#allocation7 + $0x68] sm:$0xff]
      %v166 = vld [vmem:[#allocation7 + $0x70] sm:$0xff]
      %v167 = vld [vmem:[#allocation7 + $0x78] sm:$0xff]
      %v168 = vld [vmem:[#allocation9] sm:$0x1]
      %v170 = vlaneseq
      %v171 = vshrl.u32 %v170, 7
      %v172 = vsub.s32 0, %v171
      %v173 = vrot.slane %v168, %v172
      %175 = vmatprep.subr.mxu0 0.0
      %176 = vmatpush1.msra.mxu0 %v152
      %177 = vmatprep.subr.mxu0 0.0
      %178 = vmatpush1.msra.mxu0 %v153
      %179 = vmatprep.subr.mxu0 0.0
      %180 = vmatpush1.msra.mxu0 %v154
      %181 = vmatprep.subr.mxu0 0.0
      %182 = vmatpush1.msra.mxu0 %v155
      %183 = vmatprep.subr.mxu0 0.0
      %184 = vmatpush1.msra.mxu0 %v156
      %185 = vmatprep.subr.mxu0 0.0
      %186 = vmatpush1.msra.mxu0 %v157
      %187 = vmatprep.subr.mxu0 0.0
      %188 = vmatpush1.msra.mxu0 %v158
      %189 = vmatprep.subr.mxu0 0.0
      %190 = vmatpush1.msra.mxu0 %v159
      %191 = vmatprep.subr.mxu0 0.0
      %192 = vmatpush1.msra.mxu0 %v160
      %193 = vmatprep.subr.mxu0 0.0
      %194 = vmatpush1.msra.mxu0 %v161
      %195 = vmatprep.subr.mxu0 0.0
      %196 = vmatpush1.msra.mxu0 %v162
      %197 = vmatprep.subr.mxu0 0.0
      %198 = vmatpush1.msra.mxu0 %v163
      %199 = vmatprep.subr.mxu0 0.0
      %200 = vmatpush1.msra.mxu0 %v164
      %201 = vmatprep.subr.mxu0 0.0
      %202 = vmatpush1.msra.mxu0 %v165
      %203 = vmatprep.subr.mxu0 0.0
      %204 = vmatpush1.msra.mxu0 %v166
      %205 = vmatprep.subr.mxu0 0.0
      %206 = vmatpush1.msra.mxu0 %v167
      %207 = vmatprep.subr.mxu0 0.0
      %208 = vmatpush1.msra.mxu0 0.0
      %209 = vmatprep.subr.mxu0 0.0
      %210 = vmatpush1.msra.mxu0 0.0
      %211 = vmatprep.subr.mxu0 0.0
      %212 = vmatpush1.msra.mxu0 0.0
      %213 = vmatprep.subr.mxu0 0.0
      %214 = vmatpush1.msra.mxu0 0.0
      %215 = vmatprep.subr.mxu0 0.0
      %216 = vmatpush1.msra.mxu0 0.0
      %217 = vmatprep.subr.mxu0 0.0
      %218 = vmatpush1.msra.mxu0 0.0
      %219 = vmatprep.subr.mxu0 0.0
      %220 = vmatpush1.msra.mxu0 0.0
      %221 = vmatprep.subr.mxu0 0.0
      %222 = vmatpush1.msra.mxu0 0.0
      %223 = vmatprep.subr.mxu0 0.0
      %224 = vmatpush1.msra.mxu0 0.0
      %225 = vmatprep.subr.mxu0 0.0
      %226 = vmatpush1.msra.mxu0 0.0
      %227 = vmatprep.subr.mxu0 0.0
      %228 = vmatpush1.msra.mxu0 0.0
      %229 = vmatprep.subr.mxu0 0.0
      %230 = vmatpush1.msra.mxu0 0.0
      %231 = vmatprep.subr.mxu0 0.0
      %232 = vmatpush1.msra.mxu0 0.0
      %233 = vmatprep.subr.mxu0 0.0
      %234 = vmatpush1.msra.mxu0 0.0
      %235 = vmatprep.subr.mxu0 0.0
      %236 = vmatpush1.msra.mxu0 0.0
      %237 = vmatprep.subr.mxu0 0.0
      %238 = vmatpush1.msra.mxu0 0.0
      %239 = vmatprep.mubr.f32.mxu0 0.0
      %240 = vmatmul.mubr.f32.gmra.mrb[0].mxu0 %v151
      %v241 = vpop.f32.mrb[0].mxu0
      %v242 = vadd.f32 %v173, %v241
      %v243 = vpop.f32.mrb[0].mxu0
      %244 = vdwg.mxu0
      %245 = vst [vmem:[#allocation10] sm:$0xff] %v242
    $region37: #{tpu_custom_call.1} parent=1 // pred_fallthru
      _
    // Predicated region
    $region38: #{tpu_custom_call.1} parent=1 // pred_check
      _
    $region39: #{tpu_custom_call.1} parent=1 // pred_check_branch
      %247 = sbr.rel (0) target = $region41
    $region40: #{tpu_custom_call.1} parent=1 // pred_region
      %s249 = ssub.s32 128, 128
      %250 = vsyncadd [#allocation6], %s249
      %s252 = sshll.u32 [#allocation10], 4
      %s253 = int_to_ptr.vmem [resolvable:$true] %s252
      %255 = dma.vmem_to_hbm [thread:$0]  %s253, 128, %s4, [#allocation6]
    $region41: #{tpu_custom_call.1} parent=1 // pred_fallthru
      _
    // Predicated region
    $region42: #{tpu_custom_call.1} parent=1 // pred_check
      _
    $region43: #{tpu_custom_call.1} parent=1 // pred_check_branch
      %257 = sbr.rel (0) target = $region45
    $region44: #{tpu_custom_call.1} parent=1 // pred_region
      %258 = dma.done [#allocation6], 128
    $region45: #{tpu_custom_call.1} parent=1 // pred_fallthru
      _
    %259 = vsyncpa [#allocation5], 1
    %260 = vsyncpa [#allocation8], 1
    %261 = vsyncpa [#allocation6], 1

</llo_original>
